<compile_context>
chip_gen: v7x
topology: tpu7x:2x2x1
jax: 0.10.0
libtpu: 0.0.40
codegen_flags: <defaults>
</compile_context>

<pallas_src>
import jax
import jax.numpy as jnp
from jax.experimental import pallas as pl
from jax.experimental.pallas import tpu as pltpu


# ----------------------------- Pallas kernel ------------------------------ #
def _adapter_kernel(s_ref, x_ref, d_ref, u_ref, o_ref):
    # s_ref: (1,) f32 in SMEM   x_ref: (tm, E)   d_ref: (E, Lp)   u_ref: (Lp, E)
    x = x_ref[...]
    h = jnp.dot(x, d_ref[...], preferred_element_type=jnp.float32)   # MXU #1
    h = jnp.maximum(h, 0.0)                                          # ReLU
    h = h.astype(x_ref.dtype)            # bf16-native second matmul when x is bf16
    y = jnp.dot(h, u_ref[...], preferred_element_type=jnp.float32)   # MXU #2
    o_ref[...] = (y * s_ref[0]).astype(o_ref.dtype)


# ----------------------------- tile selection ------------------------------ #
def _round_up(a, b):
    return ((a + b - 1) // b) * b


def _pick_tm(M, E, L_pad, dsize, vmem_budget=20 * 1024 * 1024):
    """Largest row tile whose double-buffered working set fits the budget."""
    weight_bytes = 2 * (2 * E * L_pad * dsize)       # D_ + U_, double-buffered
    per_row = 4 * E * dsize                          # x + out tiles, double-buffered
    avail = max(vmem_budget - weight_bytes, 8 * per_row)
    tm = int(min(avail // per_row, 1024))
    if tm >= 256:
        tm -= tm % 256                               # MXU-friendly (>=2 full passes)
    else:
        tm -= tm % 8                                 # sublane multiple
    m_ceil = _round_up(M, 8)
    tm = min(tm, m_ceil)                             # don't over-tile tiny inputs
    return max(tm, 8)


# ----------------------------- pallas_call wrapper ------------------------- #
def _adapter_matmul(x2d, d_w, u_w, s_scalar, *, tm):
    M, E = x2d.shape
    _, L = d_w.shape
    assert M % tm == 0
    grid = (M // tm,)
    dsize = x2d.dtype.itemsize
    cost = pl.CostEstimate(
        flops=4 * M * E * L,                                  # two matmuls
        transcendentals=0,
        bytes_accessed=2 * M * E * dsize + 2 * E * L * dsize,  # read x, write y, weights
    )
    return pl.pallas_call(
        _adapter_kernel,
        out_shape=jax.ShapeDtypeStruct((M, E), x2d.dtype),
        grid=grid,
        in_specs=[
            pl.BlockSpec(memory_space=pltpu.MemorySpace.SMEM),   # scale S
            pl.BlockSpec((tm, E), lambda i: (i, 0)),             # x tile
            # Constant block index -> fetched once, held resident across the grid.
            pl.BlockSpec((E, L), lambda i: (0, 0)),              # D_ (full)
            pl.BlockSpec((L, E), lambda i: (0, 0)),              # U_ (full)
        ],
        out_specs=pl.BlockSpec((tm, E), lambda i: (i, 0)),
        compiler_params=pltpu.CompilerParams(
            dimension_semantics=("parallel",),       # rows shard across TCs (v7x)
            vmem_limit_bytes=32 * 1024 * 1024,       # above v5e's 16 MiB default
        ),
        cost_estimate=cost,
    )(s_scalar, x2d, d_w, u_w)


# --------------------------- parameter creation ---------------------------- #
def init_stochastic_adapter_params(key, embed_dim, low_dim=64, init_value=0.1,
                                   n_layers=12):
    """Mirrors StochasticAdapter.__init__ (deterministic synthetic init)."""
    d_list, u_list, s_list = [], [], []
    for _ in range(n_layers):
        key, sub = jax.random.split(key)
        # tensor_prompt(2, E, L, init='he_uniform'): kaiming_uniform_(a=1) on p[0]
        # -> bound = sqrt(3 / fan_in), fan_in = low_dim, then copy row 0 to row 1.
        bound = (3.0 / low_dim) ** 0.5
        d0 = jax.random.uniform(sub, (embed_dim, low_dim),
                                minval=-bound, maxval=bound, dtype=jnp.float32)
        d_list.append(jnp.stack([d0, d0], axis=0))              # (2, E, L)
        u_list.append(jnp.zeros((2, low_dim, embed_dim), jnp.float32))
        s_list.append(init_value * jnp.ones((2,), jnp.float32))
    return {
        "d": d_list,
        "u": u_list,
        "s": s_list,
        "adapt_layers": list(range(n_layers)),
    }


# ------------------------------ forward pass ------------------------------- #
def stochastic_adapter_forward(params, x, l, f):
    """x: (B, N, E); l: python int layer index; f: 0 or 1.

    Feed x in bf16 for the production (HBM-traffic-halved, MXU-native) path;
    accumulation is always f32, output dtype == x.dtype.
    """
    if l not in params["adapt_layers"]:
        return 0  # matches PyTorch: returns scalar 0
        # TODO(synk): returning python 0 (like the torch module) is not an array;
        # jit/vmap callers expecting arrays should handle this branch outside.

    D_ = params["d"][l][f].astype(x.dtype)          # (E, L)
    U_ = params["u"][l][f].astype(x.dtype)          # (L, E)
    S = params["s"][l][f]                           # scalar
    B, N, E = x.shape
    M = B * N
    x2d = x.reshape(M, E)

    # Zero-pad low_dim to a lane-dense multiple of 128 (exact no-op math-wise).
    L = D_.shape[1]
    L_pad = _round_up(max(L, 128), 128)
    if L_pad != L:
        D_ = jnp.pad(D_, ((0, 0), (0, L_pad - L)))
        U_ = jnp.pad(U_, ((0, L_pad - L), (0, 0)))

    dsize = jnp.dtype(x.dtype).itemsize
    tm = _pick_tm(M, E, L_pad, dsize)
    M_pad = _round_up(M, tm)
    if M_pad != M:                                   # masked/padded last tile
        x2d = jnp.pad(x2d, ((0, M_pad - M), (0, 0)))

    s_arr = jnp.reshape(S.astype(jnp.float32), (1,))
    y2d = _adapter_matmul(x2d, D_, U_, s_arr, tm=tm)
    if M_pad != M:
        y2d = y2d[:M]
    y = y2d.reshape(B, N, E)
    # drop_path=0 -> DropPath is identity in both f==0 and f==1 branches.
    return y


# ---------------------------------- main ----------------------------------- #
if __name__ == "__main__":
    B, N, E, L = 2, 8, 32, 16
    key = jax.random.PRNGKey(0)
    kx, kp, ku = jax.random.split(key, 3)
    x = jax.random.normal(kx, (B, N, E), dtype=jnp.float32)

    params = init_stochastic_adapter_params(kp, embed_dim=E, low_dim=L,
                                            init_value=0.1)

    # 1) Module-faithful forward (u is zero-init, as in the PyTorch module).
    out = stochastic_adapter_forward(params, x, l=3, f=0)
    out = jax.block_until_ready(out)
    D_ = params["d"][3][0]
    U_ = params["u"][3][0]
    S = params["s"][3][0]
    ref = jnp.einsum("bnd,ds->bns", x, D_)
    ref = jnp.maximum(ref, 0.0)
    ref = jnp.einsum("bns,sd->bnd", ref, U_) * S
    assert out.shape == (B, N, E)
    assert out.dtype == x.dtype
    assert jnp.allclose(out, ref, atol=1e-5), "mismatch vs reference (module init)"

    # 2) Non-trivial weights to actually exercise the math (f32, tight tol).
    params2 = dict(params)
    u_rand = jax.random.normal(ku, (2, L, E), dtype=jnp.float32) * 0.05
    params2["u"] = [u_rand for _ in range(12)]
    out2 = jax.block_until_ready(stochastic_adapter_forward(params2, x, l=5, f=1))
    D2, U2, S2 = params2["d"][5][1], params2["u"][5][1], params2["s"][5][1]
    ref2 = jnp.einsum("bnd,ds->bns", x, D2)
    ref2 = jnp.maximum(ref2, 0.0)
    ref2 = jnp.einsum("bns,sd->bnd", ref2, U2) * S2
    assert jnp.allclose(out2, ref2, atol=1e-4, rtol=1e-4), "mismatch (f32 path)"

    # 3) bf16 activation path (production / mem-bound config), loose tol.
    out3 = jax.block_until_ready(
        stochastic_adapter_forward(params2, x.astype(jnp.bfloat16), l=5, f=1))
    assert out3.dtype == jnp.bfloat16
    assert jnp.allclose(out3.astype(jnp.float32), ref2, atol=5e-2, rtol=5e-2), \
        "mismatch (bf16 path)"

    # 4) Non-adapted layer branch.
    assert stochastic_adapter_forward(params, x, l=99, f=1) == 0

    print("KERNEL_OK")
</pallas_src>

<mosaic_0001>
module attributes {stable_mosaic.version = 11 : i64} {
  func.func @_adapter_kernel(%arg0: i32, %arg1: memref<1xf32, #tpu.memory_space<smem>>, %arg2: memref<16x32xf32, #tpu.memory_space<vmem>>, %arg3: memref<32x128xf32, #tpu.memory_space<vmem>>, %arg4: memref<128x32xf32, #tpu.memory_space<vmem>>, %arg5: memref<16x32xf32, #tpu.memory_space<vmem>>) attributes {dimension_semantics = [#tpu.dimension_semantics<parallel>], iteration_bounds = array<i64: 1>, scalar_prefetch = 0 : i64, scratch_operands = 0 : i64, tpu.core_type = #tpu.core_type<tc>, window_params = [{transform_indices = @transform_0, window_bounds = array<i64: 1>}, {transform_indices = @transform_1, window_bounds = array<i64: 16, 32>}, {pipeline_mode = #tpu.pipeline_mode<synchronous>, transform_indices = @transform_2, window_bounds = array<i64: 32, 128>}, {pipeline_mode = #tpu.pipeline_mode<synchronous>, transform_indices = @transform_3, window_bounds = array<i64: 128, 32>}, {transform_indices = @transform_4, window_bounds = array<i64: 16, 32>}]} {
    %c0 = arith.constant 0 : index
    %c0_0 = arith.constant 0 : index
    %0 = vector.load %arg2[%c0, %c0_0] : memref<16x32xf32, #tpu.memory_space<vmem>>, vector<16x32xf32>
    %c0_1 = arith.constant 0 : index
    %c0_2 = arith.constant 0 : index
    %1 = vector.load %arg3[%c0_1, %c0_2] : memref<32x128xf32, #tpu.memory_space<vmem>>, vector<32x128xf32>
    %cst = arith.constant dense<0.000000e+00> : vector<16x128xf32>
    %2 = tpu.matmul %0, %1, %cst {dimension_numbers = #tpu.dot_dimension_numbers<[1], [0], [0], [1], [0, 0, 1, 1], [], []>} : vector<16x32xf32>, vector<32x128xf32>, vector<16x128xf32> -> vector<16x128xf32>
    %cst_3 = arith.constant 0.000000e+00 : f32
    %3 = vector.broadcast %cst_3 : f32 to vector<16x128xf32>
    %4 = arith.maximumf %2, %3 : vector<16x128xf32>
    %c0_4 = arith.constant 0 : index
    %c0_5 = arith.constant 0 : index
    %5 = vector.load %arg4[%c0_4, %c0_5] : memref<128x32xf32, #tpu.memory_space<vmem>>, vector<128x32xf32>
    %cst_6 = arith.constant dense<0.000000e+00> : vector<16x32xf32>
    %6 = tpu.matmul %4, %5, %cst_6 {dimension_numbers = #tpu.dot_dimension_numbers<[1], [0], [0], [1], [0, 0, 1, 1], [], []>} : vector<16x128xf32>, vector<128x32xf32>, vector<16x32xf32> -> vector<16x32xf32>
    %c0_7 = arith.constant 0 : index
    %7 = memref.load %arg1[%c0_7] : memref<1xf32, #tpu.memory_space<smem>>
    %8 = vector.broadcast %7 : f32 to vector<16x32xf32>
    %9 = arith.mulf %6, %8 : vector<16x32xf32>
    %c0_8 = arith.constant 0 : index
    %c0_9 = arith.constant 0 : index
    %10 = vector.load %arg5[%c0_8, %c0_9] : memref<16x32xf32, #tpu.memory_space<vmem>>, vector<16x32xf32>
    tpu.vector_store %arg5[%c0_8, %c0_9], %9 {strides = array<i32>} : memref<16x32xf32, #tpu.memory_space<vmem>>, vector<16x32xf32>,
    return
  }
  func.func @transform_0(%arg0: i32) -> i32 {
    %c0_i32 = arith.constant 0 : i32
    %c0_i32_0 = arith.constant 0 : i32
    return %c0_i32 : i32
  }
  func.func @transform_1(%arg0: i32) -> (i32, i32) {
    %c0_i32 = arith.constant 0 : i32
    %c0_i32_0 = arith.constant 0 : i32
    return %arg0, %c0_i32 : i32, i32
  }
  func.func @transform_2(%arg0: i32) -> (i32, i32) {
    %c0_i32 = arith.constant 0 : i32
    %c0_i32_0 = arith.constant 0 : i32
    %c0_i32_1 = arith.constant 0 : i32
    return %c0_i32, %c0_i32_0 : i32, i32
  }
  func.func @transform_3(%arg0: i32) -> (i32, i32) {
    %c0_i32 = arith.constant 0 : i32
    %c0_i32_0 = arith.constant 0 : i32
    %c0_i32_1 = arith.constant 0 : i32
    return %c0_i32, %c0_i32_0 : i32, i32
  }
  func.func @transform_4(%arg0: i32) -> (i32, i32) {
    %c0_i32 = arith.constant 0 : i32
    %c0_i32_0 = arith.constant 0 : i32
    return %arg0, %c0_i32 : i32, i32
  }
}

</mosaic_0001>

<llo_original>
// kernel: tpu_custom_call.1
$region0: #{tpu_custom_call.1}
  #allocation0 [shape = 'u32[]', space=smem, size = 0x4, offset = 0x4, fixed_abs, tag = 'smem constant byte address 0x4 - core index']
  #allocation1 [shape = 'u32[144,128]{1,0:T(1,128)}', space=vmem, size = 0x12000, scoped, tag = 'internal scratch']
  #allocation2 [shape = 'f32[1]{0:T(128)S(6)}', space=smem, size = 0x200, scoped, tag = 'scoped memory for tpu_custom_call.1']
  %s0 = inlined_call_operand.<no memory space> [shape: f32[1], index: 0, kind: input, shape index: {}]
  %s1 = inlined_call_operand.vmem [shape: f32[16,32], index: 1, kind: input, shape index: {}]
  %s2 = inlined_call_operand.vmem [shape: f32[32,128], index: 2, kind: input, shape index: {}]
  %s3 = inlined_call_operand.vmem [shape: f32[128,32], index: 3, kind: input, shape index: {}]
  %s4 = inlined_call_operand.hbm [shape: f32[16,32], index: 4, kind: output, shape index: {}]
  %s5 = sld [smem:[#allocation0]]
  $region26: #{tpu_custom_call.1} parent=0
    _
  %s7 = ssub.s32 1, %s5
  %s8 = scalar_select 0, %s7, %s5
  %9 = sst [smem:[#allocation2]] %s0
  $region1: #{tpu_custom_call.1} parent=0
    #allocation3 [shape = 'u8[8192]{0}', space=vmem, size = 0x2000, scoped, tag = 'output window, operand 0, single buffered']
    #allocation4 [shape = 's32[1]{0}', space=sflag, size = 0x4, scoped, tag = 'scoped memory for tpu_custom_call.1']
    %10 = vsyncpa [#allocation4], 0
    // Predicated region
    $region2: #{tpu_custom_call.1} parent=1 // pred_check
      _
    $region3: #{tpu_custom_call.1} parent=1 // pred_check_branch
      %12 = sbr.rel (0) target = $region5
    $region4: #{tpu_custom_call.1} parent=1 // pred_region
      _
    $region5: #{tpu_custom_call.1} parent=1 // pred_fallthru
      _
    // Predicated region
    $region6: #{tpu_custom_call.1} parent=1 // pred_check
      _
    $region7: #{tpu_custom_call.1} parent=1 // pred_check_branch
      %14 = sbr.rel (0) target = $region9
    $region8: #{tpu_custom_call.1} parent=1 // pred_region
      _
    $region9: #{tpu_custom_call.1} parent=1 // pred_fallthru
      _
    // Predicated region
    $region10: #{tpu_custom_call.1} parent=1 // pred_check
      _
    $region11: #{tpu_custom_call.1} parent=1 // pred_check_branch
      %16 = sbr.rel (0) target = $region13
    $region12: #{tpu_custom_call.1} parent=1 // pred_region
      _
    $region13: #{tpu_custom_call.1} parent=1 // pred_fallthru
      _
    // Predicated region
    $region14: #{tpu_custom_call.1} parent=1 // pred_check
      _
    $region15: #{tpu_custom_call.1} parent=1 // pred_check_branch
      %18 = sbr.rel (0) target = $region17
    $region16: #{tpu_custom_call.1} parent=1 // pred_region
      _
    $region17: #{tpu_custom_call.1} parent=1 // pred_fallthru
      _
    %v19 = vld [vmem:[%s1] sm:$0xff]
    %v20 = vld [vmem:[%s1 + $0x8] sm:$0xff]
    %v21 = vld [vmem:[%s2] sm:$0xff]
    %v22 = vld [vmem:[%s2 + $0x8] sm:$0xff]
    %v23 = vld [vmem:[%s2 + $0x10] sm:$0xff]
    %v24 = vld [vmem:[%s2 + $0x18] sm:$0xff]
    %vm25 = vcmask 261120
    %v27 = vsel %vm25, %v19, 0
    %v30 = vsel %vm25, %v20, 0
    %32 = vmatprep.subr.mxu0 0.0
    %33 = vmatpush1.msra.mxu0 %v21
    %34 = vmatprep.subr.mxu0 0.0
    %35 = vmatpush1.msra.mxu0 %v22
    %36 = vmatprep.subr.mxu0 0.0
    %37 = vmatpush1.msra.mxu0 %v23
    %38 = vmatprep.subr.mxu0 0.0
    %39 = vmatpush1.msra.mxu0 %v24
    %40 = vmatprep.subr.mxu0 0.0
    %41 = vmatpush1.msra.mxu0 0.0
    %42 = vmatprep.subr.mxu0 0.0
    %43 = vmatpush1.msra.mxu0 0.0
    %44 = vmatprep.subr.mxu0 0.0
    %45 = vmatpush1.msra.mxu0 0.0
    %46 = vmatprep.subr.mxu0 0.0
    %47 = vmatpush1.msra.mxu0 0.0
    %48 = vmatprep.subr.mxu0 0.0
    %49 = vmatpush1.msra.mxu0 0.0
    %50 = vmatprep.subr.mxu0 0.0
    %51 = vmatpush1.msra.mxu0 0.0
    %52 = vmatprep.subr.mxu0 0.0
    %53 = vmatpush1.msra.mxu0 0.0
    %54 = vmatprep.subr.mxu0 0.0
    %55 = vmatpush1.msra.mxu0 0.0
    %56 = vmatprep.subr.mxu0 0.0
    %57 = vmatpush1.msra.mxu0 0.0
    %58 = vmatprep.subr.mxu0 0.0
    %59 = vmatpush1.msra.mxu0 0.0
    %60 = vmatprep.subr.mxu0 0.0
    %61 = vmatpush1.msra.mxu0 0.0
    %62 = vmatprep.subr.mxu0 0.0
    %63 = vmatpush1.msra.mxu0 0.0
    %64 = vmatprep.subr.mxu0 0.0
    %65 = vmatpush1.msra.mxu0 0.0
    %66 = vmatprep.subr.mxu0 0.0
    %67 = vmatpush1.msra.mxu0 0.0
    %68 = vmatprep.subr.mxu0 0.0
    %69 = vmatpush1.msra.mxu0 0.0
    %70 = vmatprep.subr.mxu0 0.0
    %71 = vmatpush1.msra.mxu0 0.0
    %72 = vmatprep.subr.mxu0 0.0
    %73 = vmatpush1.msra.mxu0 0.0
    %74 = vmatprep.subr.mxu0 0.0
    %75 = vmatpush1.msra.mxu0 0.0
    %76 = vmatprep.subr.mxu0 0.0
    %77 = vmatpush1.msra.mxu0 0.0
    %78 = vmatprep.subr.mxu0 0.0
    %79 = vmatpush1.msra.mxu0 0.0
    %80 = vmatprep.subr.mxu0 0.0
    %81 = vmatpush1.msra.mxu0 0.0
    %82 = vmatprep.subr.mxu0 0.0
    %83 = vmatpush1.msra.mxu0 0.0
    %84 = vmatprep.subr.mxu0 0.0
    %85 = vmatpush1.msra.mxu0 0.0
    %86 = vmatprep.subr.mxu0 0.0
    %87 = vmatpush1.msra.mxu0 0.0
    %88 = vmatprep.subr.mxu0 0.0
    %89 = vmatpush1.msra.mxu0 0.0
    %90 = vmatprep.subr.mxu0 0.0
    %91 = vmatpush1.msra.mxu0 0.0
    %92 = vmatprep.subr.mxu0 0.0
    %93 = vmatpush1.msra.mxu0 0.0
    %94 = vmatprep.subr.mxu0 0.0
    %95 = vmatpush1.msra.mxu0 0.0
    %96 = vmatprep.mubr.f32.mxu0 0.0
    %97 = vmatmul.mubr.f32.gmra.mrb[0].mxu0 %v27
    %v98 = vpop.f32.mrb[0].mxu0
    %v99 = vadd.f32 0.0, %v98
    %v100 = vpop.f32.mrb[0].mxu0
    %101 = vmatprep.mubr.f32.mxu0 0.0
    %102 = vmatmul.mubr.f32.gmra.mrb[0].mxu0 %v30
    %v103 = vpop.f32.mrb[0].mxu0
    %v104 = vadd.f32 0.0, %v103
    %v105 = vpop.f32.mrb[0].mxu0
    %106 = vdwg.mxu0
    %v107 = vmax.f32 %v99, 0.0
    %v108 = vmax.f32 %v104, 0.0
    %v109 = vld [vmem:[%s3] sm:$0xff]
    %v110 = vld [vmem:[%s3 + $0x8] sm:$0xff]
    %v111 = vld [vmem:[%s3 + $0x10] sm:$0xff]
    %v112 = vld [vmem:[%s3 + $0x18] sm:$0xff]
    %v113 = vld [vmem:[%s3 + $0x20] sm:$0xff]
    %v114 = vld [vmem:[%s3 + $0x28] sm:$0xff]
    %v115 = vld [vmem:[%s3 + $0x30] sm:$0xff]
    %v116 = vld [vmem:[%s3 + $0x38] sm:$0xff]
    %v117 = vld [vmem:[%s3 + $0x40] sm:$0xff]
    %v118 = vld [vmem:[%s3 + $0x48] sm:$0xff]
    %v119 = vld [vmem:[%s3 + $0x50] sm:$0xff]
    %v120 = vld [vmem:[%s3 + $0x58] sm:$0xff]
    %v121 = vld [vmem:[%s3 + $0x60] sm:$0xff]
    %v122 = vld [vmem:[%s3 + $0x68] sm:$0xff]
    %v123 = vld [vmem:[%s3 + $0x70] sm:$0xff]
    %v124 = vld [vmem:[%s3 + $0x78] sm:$0xff]
    %125 = vmatprep.subr.mxu0 0.0
    %126 = vmatpush1.msra.mxu0 %v109
    %127 = vmatprep.subr.mxu0 0.0
    %128 = vmatpush1.msra.mxu0 %v110
    %129 = vmatprep.subr.mxu0 0.0
    %130 = vmatpush1.msra.mxu0 %v111
    %131 = vmatprep.subr.mxu0 0.0
    %132 = vmatpush1.msra.mxu0 %v112
    %133 = vmatprep.subr.mxu0 0.0
    %134 = vmatpush1.msra.mxu0 %v113
    %135 = vmatprep.subr.mxu0 0.0
    %136 = vmatpush1.msra.mxu0 %v114
    %137 = vmatprep.subr.mxu0 0.0
    %138 = vmatpush1.msra.mxu0 %v115
    %139 = vmatprep.subr.mxu0 0.0
    %140 = vmatpush1.msra.mxu0 %v116
    %141 = vmatprep.subr.mxu0 0.0
    %142 = vmatpush1.msra.mxu0 %v117
    %143 = vmatprep.subr.mxu0 0.0
    %144 = vmatpush1.msra.mxu0 %v118
    %145 = vmatprep.subr.mxu0 0.0
    %146 = vmatpush1.msra.mxu0 %v119
    %147 = vmatprep.subr.mxu0 0.0
    %148 = vmatpush1.msra.mxu0 %v120
    %149 = vmatprep.subr.mxu0 0.0
    %150 = vmatpush1.msra.mxu0 %v121
    %151 = vmatprep.subr.mxu0 0.0
    %152 = vmatpush1.msra.mxu0 %v122
    %153 = vmatprep.subr.mxu0 0.0
    %154 = vmatpush1.msra.mxu0 %v123
    %155 = vmatprep.subr.mxu0 0.0
    %156 = vmatpush1.msra.mxu0 %v124
    %157 = vmatprep.subr.mxu0 0.0
    %158 = vmatpush1.msra.mxu0 0.0
    %159 = vmatprep.subr.mxu0 0.0
    %160 = vmatpush1.msra.mxu0 0.0
    %161 = vmatprep.subr.mxu0 0.0
    %162 = vmatpush1.msra.mxu0 0.0
    %163 = vmatprep.subr.mxu0 0.0
    %164 = vmatpush1.msra.mxu0 0.0
    %165 = vmatprep.subr.mxu0 0.0
    %166 = vmatpush1.msra.mxu0 0.0
    %167 = vmatprep.subr.mxu0 0.0
    %168 = vmatpush1.msra.mxu0 0.0
    %169 = vmatprep.subr.mxu0 0.0
    %170 = vmatpush1.msra.mxu0 0.0
    %171 = vmatprep.subr.mxu0 0.0
    %172 = vmatpush1.msra.mxu0 0.0
    %173 = vmatprep.subr.mxu0 0.0
    %174 = vmatpush1.msra.mxu0 0.0
    %175 = vmatprep.subr.mxu0 0.0
    %176 = vmatpush1.msra.mxu0 0.0
    %177 = vmatprep.subr.mxu0 0.0
    %178 = vmatpush1.msra.mxu0 0.0
    %179 = vmatprep.subr.mxu0 0.0
    %180 = vmatpush1.msra.mxu0 0.0
    %181 = vmatprep.subr.mxu0 0.0
    %182 = vmatpush1.msra.mxu0 0.0
    %183 = vmatprep.subr.mxu0 0.0
    %184 = vmatpush1.msra.mxu0 0.0
    %185 = vmatprep.subr.mxu0 0.0
    %186 = vmatpush1.msra.mxu0 0.0
    %187 = vmatprep.subr.mxu0 0.0
    %188 = vmatpush1.msra.mxu0 0.0
    %189 = vmatprep.mubr.f32.mxu0 0.0
    %190 = vmatmul.mubr.f32.gmra.mrb[0].mxu0 %v107
    %v191 = vpop.f32.mrb[0].mxu0
    %v192 = vadd.f32 0.0, %v191
    %v193 = vpop.f32.mrb[0].mxu0
    %194 = vmatprep.mubr.f32.mxu0 0.0
    %195 = vmatmul.mubr.f32.gmra.mrb[0].mxu0 %v108
    %v196 = vpop.f32.mrb[0].mxu0
    %v197 = vadd.f32 0.0, %v196
    %v198 = vpop.f32.mrb[0].mxu0
    %199 = vdwg.mxu0
    %s200 = sld [smem:[#allocation2]]
    %v201 = vstv %s200
    %v202 = vmul.f32 %v192, %v201
    %v203 = vmul.f32 %v197, %v201
    %204 = vst.msk [vmem:[#allocation3] sm:$0xff] %vm25, %v202
    %205 = vst.msk [vmem:[#allocation3 + $0x8] sm:$0xff] %vm25, %v203
    // Predicated region
    $region18: #{tpu_custom_call.1} parent=1 // pred_check
      _
    $region19: #{tpu_custom_call.1} parent=1 // pred_check_branch
      %207 = sbr.rel (0) target = $region21
    $region20: #{tpu_custom_call.1} parent=1 // pred_region
      %s209 = ssub.s32 256, 256
      %210 = vsyncadd [#allocation4], %s209
      %s211 = sshll.u32 [#allocation3], 4
      %s212 = int_to_ptr.vmem [resolvable:$true] %s211
      %217 = dma.vmem_to_hbm [thread:$0]  %s212, 256, %s4, [#allocation4], 128, 128, 8
    $region21: #{tpu_custom_call.1} parent=1 // pred_fallthru
      _
    // Predicated region
    $region22: #{tpu_custom_call.1} parent=1 // pred_check
      _
    $region23: #{tpu_custom_call.1} parent=1 // pred_check_branch
      %219 = sbr.rel (0) target = $region25
    $region24: #{tpu_custom_call.1} parent=1 // pred_region
      %220 = dma.done [#allocation4], 256
    $region25: #{tpu_custom_call.1} parent=1 // pred_fallthru
      _
    %221 = vsyncpa [#allocation4], 1

</llo_original>
